<compile_context>
chip_gen: v7x
topology: tpu7x:2x2x1
jax: 0.10.0
libtpu: 0.0.40
codegen_flags: <defaults>
</compile_context>

<pallas_src>
import jax
import jax.numpy as jnp
from jax.experimental import pallas as pl
from jax.experimental.pallas import tpu as pltpu


def _round_up(n, m):
    return ((n + m - 1) // m) * m


def ffn_kernel(x_ref, w1_ref, b1_ref, w2r_ref, b2_ref, o_ref):
    # Layer 1 on the MXU: (TB, F) @ (F, H), f32 accumulation.
    h = jnp.dot(x_ref[...], w1_ref[...], preferred_element_type=jnp.float32)
    h = jnp.maximum(h + b1_ref[...], 0.0)            # bias + ReLU on the VPU (f32)
    # Layer 2 (H -> 1), emitted lane-dense as a (1, TB) row:
    #   out_row = w2_row @ h^T + b2
    out = jnp.dot(w2r_ref[...], h.T, preferred_element_type=jnp.float32)  # (1, TB)
    out = out + b2_ref[...]                          # (1, 1) broadcast
    o_ref[...] = out.reshape(o_ref.shape).astype(o_ref.dtype)


def feedforward_network(x, w1, b1, w2, b2, *, block_batch=None, mxu_dtype=None):
    """Fused FFN forward.  x: (B, n_features) -> (B, 1) float32.

    Weights are stored transposed w.r.t. torch's (out, in) convention:
      w1: (n_features, 32), b1: (32,) or (1, 32), w2: (32, 1), b2: (1,) or (1, 1).
    `mxu_dtype=jnp.bfloat16` casts the layer-1 MXU operands (f32 accumulate).
    """
    B, F = x.shape
    H = w1.shape[1]

    b1 = jnp.asarray(b1, jnp.float32).reshape(1, H)
    w2r = jnp.asarray(w2, jnp.float32).reshape(1, H)   # (1, 32) row vector
    b2 = jnp.asarray(b2, jnp.float32).reshape(1, 1)

    if mxu_dtype is not None:
        # Memory-bound kernel: narrower streamed activations halve HBM traffic.
        # (A real caller would keep x in bf16 in HBM to get the full win.)
        x = x.astype(mxu_dtype)
        w1 = w1.astype(mxu_dtype)

    # Batch tile: multiple of 128 (lane-dense output rows), capped at 2048.
    # TODO(synk): sweep block_batch in {512, 1024, 2048, 4096} per generation.
    if block_batch is None:
        block_batch = min(2048, _round_up(B, 128))
    tb = max(128, _round_up(block_batch, 128))

    grid = pl.cdiv(B, tb)
    b_pad = grid * tb
    if b_pad != B:
        x = jnp.pad(x, ((0, b_pad - B), (0, 0)))

    out = pl.pallas_call(
        ffn_kernel,
        out_shape=jax.ShapeDtypeStruct((grid, 1, tb), jnp.float32),
        grid=(grid,),
        in_specs=[
            pl.BlockSpec((tb, F), lambda i: (i, 0)),   # x: streamed per tile
            pl.BlockSpec((F, H), lambda i: (0, 0)),    # w1: resident
            pl.BlockSpec((1, H), lambda i: (0, 0)),    # b1: resident
            pl.BlockSpec((1, H), lambda i: (0, 0)),    # w2 row: resident
            pl.BlockSpec((1, 1), lambda i: (0, 0)),    # b2: resident
        ],
        out_specs=pl.BlockSpec((1, 1, tb), lambda i: (i, 0, 0)),
        compiler_params=pltpu.CompilerParams(
            dimension_semantics=("parallel",)),
    )(x, w1, b1, w2r, b2)

    # (grid, 1, TB) -> (b_pad, 1) -> drop padding -> (B, 1)
    return out.reshape(b_pad, 1)[:B]


def feedforward_reference(x, w1, b1, w2, b2):
    h = jnp.maximum(x @ w1 + b1.reshape(1, -1), 0.0)
    return h @ w2 + b2.reshape(1, -1)


if __name__ == "__main__":
    # Module hyperparameters (small, consistent with the forward pass).
    batch = 8
    n_features = 16
    hidden = 32      # fixed by the module: nn.Linear(n_features, 32)
    n_out = 1        # fixed by the module: nn.Linear(32, 1)

    key = jax.random.PRNGKey(0)
    kx, kw1, kb1, kw2, kb2, kx2 = jax.random.split(key, 6)

    bound1 = 1.0 / jnp.sqrt(n_features)
    bound2 = 1.0 / jnp.sqrt(hidden)
    x  = jax.random.normal(kx, (batch, n_features), dtype=jnp.float32)
    w1 = jax.random.uniform(kw1, (n_features, hidden), jnp.float32, -bound1, bound1)
    b1 = jax.random.uniform(kb1, (hidden,), jnp.float32, -bound1, bound1)
    w2 = jax.random.uniform(kw2, (hidden, n_out), jnp.float32, -bound2, bound2)
    b2 = jax.random.uniform(kb2, (n_out,), jnp.float32, -bound2, bound2)

    # 1) Small-shape correctness (f32 end to end).
    out = feedforward_network(x, w1, b1, w2, b2)
    jax.block_until_ready(out)
    ref = feedforward_reference(x, w1, b1, w2, b2)
    assert out.shape == (batch, n_out)
    assert jnp.allclose(out, ref, atol=1e-4, rtol=1e-4)

    # 2) Multi-tile grid + batch-padding path (B not a multiple of the tile).
    big_b = 3000
    xb = jax.random.normal(kx2, (big_b, n_features), dtype=jnp.float32)
    out_big = feedforward_network(xb, w1, b1, w2, b2)
    jax.block_until_ready(out_big)
    ref_big = feedforward_reference(xb, w1, b1, w2, b2)
    assert out_big.shape == (big_b, n_out)
    assert jnp.allclose(out_big, ref_big, atol=1e-4, rtol=1e-4)

    # 3) bf16 MXU operands for layer 1 (HBM-traffic win on v6e/v7x); looser tol.
    out_bf16 = feedforward_network(xb, w1, b1, w2, b2, mxu_dtype=jnp.bfloat16)
    jax.block_until_ready(out_bf16)
    assert jnp.allclose(out_bf16, ref_big, atol=5e-2, rtol=5e-2)

    print("KERNEL_OK")
</pallas_src>

<mosaic_0001>
module attributes {stable_mosaic.version = 11 : i64} {
  func.func @ffn_kernel(%arg0: i32, %arg1: memref<128x16xf32, #tpu.memory_space<vmem>>, %arg2: memref<16x32xf32, #tpu.memory_space<vmem>>, %arg3: memref<1x32xf32, #tpu.memory_space<vmem>>, %arg4: memref<1x32xf32, #tpu.memory_space<vmem>>, %arg5: memref<1x1xf32, #tpu.memory_space<vmem>>, %arg6: memref<1x1x128xf32, #tpu.memory_space<vmem>>) attributes {dimension_semantics = [#tpu.dimension_semantics<parallel>], iteration_bounds = array<i64: 1>, scalar_prefetch = 0 : i64, scratch_operands = 0 : i64, tpu.core_type = #tpu.core_type<tc>, window_params = [{transform_indices = @transform_0, window_bounds = array<i64: 128, 16>}, {pipeline_mode = #tpu.pipeline_mode<synchronous>, transform_indices = @transform_1, window_bounds = array<i64: 16, 32>}, {pipeline_mode = #tpu.pipeline_mode<synchronous>, transform_indices = @transform_2, window_bounds = array<i64: 1, 32>}, {pipeline_mode = #tpu.pipeline_mode<synchronous>, transform_indices = @transform_3, window_bounds = array<i64: 1, 32>}, {pipeline_mode = #tpu.pipeline_mode<synchronous>, transform_indices = @transform_4, window_bounds = array<i64: 1, 1>}, {transform_indices = @transform_5, window_bounds = array<i64: 1, 1, 128>}]} {
    %c0 = arith.constant 0 : index
    %c0_0 = arith.constant 0 : index
    %0 = vector.load %arg1[%c0, %c0_0] : memref<128x16xf32, #tpu.memory_space<vmem>>, vector<128x16xf32>
    %c0_1 = arith.constant 0 : index
    %c0_2 = arith.constant 0 : index
    %1 = vector.load %arg2[%c0_1, %c0_2] : memref<16x32xf32, #tpu.memory_space<vmem>>, vector<16x32xf32>
    %cst = arith.constant dense<0.000000e+00> : vector<128x32xf32>
    %2 = tpu.matmul %0, %1, %cst {dimension_numbers = #tpu.dot_dimension_numbers<[1], [0], [0], [1], [0, 0, 1, 1], [], []>} : vector<128x16xf32>, vector<16x32xf32>, vector<128x32xf32> -> vector<128x32xf32>
    %c0_3 = arith.constant 0 : index
    %c0_4 = arith.constant 0 : index
    %3 = vector.load %arg3[%c0_3, %c0_4] : memref<1x32xf32, #tpu.memory_space<vmem>>, vector<1x32xf32>
    %4 = vector.broadcast %3 : vector<1x32xf32> to vector<128x32xf32>
    %5 = arith.addf %2, %4 : vector<128x32xf32>
    %cst_5 = arith.constant 0.000000e+00 : f32
    %6 = vector.broadcast %cst_5 : f32 to vector<128x32xf32>
    %7 = arith.maximumf %5, %6 : vector<128x32xf32>
    %c0_6 = arith.constant 0 : index
    %c0_7 = arith.constant 0 : index
    %8 = vector.load %arg4[%c0_6, %c0_7] : memref<1x32xf32, #tpu.memory_space<vmem>>, vector<1x32xf32>
    %9 = tpu.transpose %7, [1, 0] : vector<128x32xf32> -> vector<32x128xf32>
    %cst_8 = arith.constant dense<0.000000e+00> : vector<1x128xf32>
    %10 = tpu.matmul %8, %9, %cst_8 {dimension_numbers = #tpu.dot_dimension_numbers<[1], [0], [0], [1], [0, 0, 1, 1], [], []>} : vector<1x32xf32>, vector<32x128xf32>, vector<1x128xf32> -> vector<1x128xf32>
    %c0_9 = arith.constant 0 : index
    %c0_10 = arith.constant 0 : index
    %11 = vector.load %arg5[%c0_9, %c0_10] : memref<1x1xf32, #tpu.memory_space<vmem>>, vector<1x1xf32>
    %12 = vector.broadcast %11 : vector<1x1xf32> to vector<1x128xf32>
    %13 = arith.addf %10, %12 : vector<1x128xf32>
    %14 = vector.shape_cast %13 : vector<1x128xf32> to vector<1x1x128xf32>
    %c0_11 = arith.constant 0 : index
    %c0_12 = arith.constant 0 : index
    %c0_13 = arith.constant 0 : index
    %15 = vector.load %arg6[%c0_11, %c0_12, %c0_13] : memref<1x1x128xf32, #tpu.memory_space<vmem>>, vector<1x1x128xf32>
    tpu.vector_store %arg6[%c0_11, %c0_12, %c0_13], %14 {strides = array<i32>} : memref<1x1x128xf32, #tpu.memory_space<vmem>>, vector<1x1x128xf32>,
    return
  }
  func.func @transform_0(%arg0: i32) -> (i32, i32) {
    %c0_i32 = arith.constant 0 : i32
    %c0_i32_0 = arith.constant 0 : i32
    return %arg0, %c0_i32 : i32, i32
  }
  func.func @transform_1(%arg0: i32) -> (i32, i32) {
    %c0_i32 = arith.constant 0 : i32
    %c0_i32_0 = arith.constant 0 : i32
    %c0_i32_1 = arith.constant 0 : i32
    return %c0_i32, %c0_i32_0 : i32, i32
  }
  func.func @transform_2(%arg0: i32) -> (i32, i32) {
    %c0_i32 = arith.constant 0 : i32
    %c0_i32_0 = arith.constant 0 : i32
    %c0_i32_1 = arith.constant 0 : i32
    return %c0_i32, %c0_i32_0 : i32, i32
  }
  func.func @transform_3(%arg0: i32) -> (i32, i32) {
    %c0_i32 = arith.constant 0 : i32
    %c0_i32_0 = arith.constant 0 : i32
    %c0_i32_1 = arith.constant 0 : i32
    return %c0_i32, %c0_i32_0 : i32, i32
  }
  func.func @transform_4(%arg0: i32) -> (i32, i32) {
    %c0_i32 = arith.constant 0 : i32
    %c0_i32_0 = arith.constant 0 : i32
    %c0_i32_1 = arith.constant 0 : i32
    return %c0_i32, %c0_i32_0 : i32, i32
  }
  func.func @transform_5(%arg0: i32) -> (i32, i32, i32) {
    %c0_i32 = arith.constant 0 : i32
    %c0_i32_0 = arith.constant 0 : i32
    %c0_i32_1 = arith.constant 0 : i32
    return %arg0, %c0_i32, %c0_i32_0 : i32, i32, i32
  }
}

</mosaic_0001>

<llo_original>
// kernel: tpu_custom_call.1
$region0: #{tpu_custom_call.1}
  #allocation0 [shape = 'u32[]', space=smem, size = 0x4, offset = 0x4, fixed_abs, tag = 'smem constant byte address 0x4 - core index']
  #allocation1 [shape = 'u32[144,128]{1,0:T(1,128)}', space=vmem, size = 0x12000, scoped, tag = 'internal scratch']
  #allocation2 [shape = 'f32[1,1]{1,0:T(1,128)S(1)}', space=vmem, size = 0x200, scoped, tag = 'scoped memory for tpu_custom_call.1']
  %s0 = inlined_call_operand.vmem [shape: f32[128,16], index: 0, kind: input, shape index: {}]
  %s1 = inlined_call_operand.vmem [shape: f32[16,32], index: 1, kind: input, shape index: {}]
  %s2 = inlined_call_operand.vmem [shape: f32[1,32], index: 2, kind: input, shape index: {}]
  %s3 = inlined_call_operand.vmem [shape: f32[1,32], index: 3, kind: input, shape index: {}]
  %s4 = inlined_call_operand.<no memory space> [shape: f32[1,1], index: 4, kind: input, shape index: {}]
  %s5 = inlined_call_operand.hbm [shape: f32[1,1,128], index: 5, kind: output, shape index: {}]
  %s6 = sld [smem:[#allocation0]]
  $region30: #{tpu_custom_call.1} parent=0
    _
  %s8 = ssub.s32 1, %s6
  %s9 = scalar_select 0, %s8, %s6
  %v10 = vstv %s4
  %11 = vst [vmem:[#allocation2] sm:$0x1] %v10
  $region1: #{tpu_custom_call.1} parent=0
    #allocation3 [shape = 'u8[512]{0}', space=vmem, size = 0x400, scoped, tag = 'output window, operand 0, single buffered']
    #allocation4 [shape = 's32[1]{0}', space=sflag, size = 0x4, scoped, tag = 'scoped memory for tpu_custom_call.1']
    %12 = vsyncpa [#allocation4], 0
    // Predicated region
    $region2: #{tpu_custom_call.1} parent=1 // pred_check
      _
    $region3: #{tpu_custom_call.1} parent=1 // pred_check_branch
      %14 = sbr.rel (0) target = $region5
    $region4: #{tpu_custom_call.1} parent=1 // pred_region
      _
    $region5: #{tpu_custom_call.1} parent=1 // pred_fallthru
      _
    // Predicated region
    $region6: #{tpu_custom_call.1} parent=1 // pred_check
      _
    $region7: #{tpu_custom_call.1} parent=1 // pred_check_branch
      %16 = sbr.rel (0) target = $region9
    $region8: #{tpu_custom_call.1} parent=1 // pred_region
      _
    $region9: #{tpu_custom_call.1} parent=1 // pred_fallthru
      _
    // Predicated region
    $region10: #{tpu_custom_call.1} parent=1 // pred_check
      _
    $region11: #{tpu_custom_call.1} parent=1 // pred_check_branch
      %18 = sbr.rel (0) target = $region13
    $region12: #{tpu_custom_call.1} parent=1 // pred_region
      _
    $region13: #{tpu_custom_call.1} parent=1 // pred_fallthru
      _
    // Predicated region
    $region14: #{tpu_custom_call.1} parent=1 // pred_check
      _
    $region15: #{tpu_custom_call.1} parent=1 // pred_check_branch
      %20 = sbr.rel (0) target = $region17
    $region16: #{tpu_custom_call.1} parent=1 // pred_region
      _
    $region17: #{tpu_custom_call.1} parent=1 // pred_fallthru
      _
    // Predicated region
    $region18: #{tpu_custom_call.1} parent=1 // pred_check
      _
    $region19: #{tpu_custom_call.1} parent=1 // pred_check_branch
      %22 = sbr.rel (0) target = $region21
    $region20: #{tpu_custom_call.1} parent=1 // pred_region
      _
    $region21: #{tpu_custom_call.1} parent=1 // pred_fallthru
      _
    %v23 = vld [vmem:[%s0] sm:$0xff]
    %v24 = vld [vmem:[%s0 + $0x8] sm:$0xff]
    %v25 = vld [vmem:[%s0 + $0x10] sm:$0xff]
    %v26 = vld [vmem:[%s0 + $0x18] sm:$0xff]
    %v27 = vld [vmem:[%s0 + $0x20] sm:$0xff]
    %v28 = vld [vmem:[%s0 + $0x28] sm:$0xff]
    %v29 = vld [vmem:[%s0 + $0x30] sm:$0xff]
    %v30 = vld [vmem:[%s0 + $0x38] sm:$0xff]
    %v31 = vld [vmem:[%s0 + $0x40] sm:$0xff]
    %v32 = vld [vmem:[%s0 + $0x48] sm:$0xff]
    %v33 = vld [vmem:[%s0 + $0x50] sm:$0xff]
    %v34 = vld [vmem:[%s0 + $0x58] sm:$0xff]
    %v35 = vld [vmem:[%s0 + $0x60] sm:$0xff]
    %v36 = vld [vmem:[%s0 + $0x68] sm:$0xff]
    %v37 = vld [vmem:[%s0 + $0x70] sm:$0xff]
    %v38 = vld [vmem:[%s0 + $0x78] sm:$0xff]
    %v39 = vld [vmem:[%s1] sm:$0xff]
    %v40 = vld [vmem:[%s1 + $0x8] sm:$0xff]
    %v41 = vld [vmem:[%s2] sm:$0x1]
    %v43 = vlaneseq
    %v44 = vshrl.u32 %v43, 7
    %v45 = vsub.s32 0, %v44
    %v46 = vrot.slane %v41, %v45
    %vm48 = vcmask 130048
    %v50 = vsel %vm48, %v23, 0
    %v53 = vsel %vm48, %v24, 0
    %v56 = vsel %vm48, %v25, 0
    %v59 = vsel %vm48, %v26, 0
    %v62 = vsel %vm48, %v27, 0
    %v65 = vsel %vm48, %v28, 0
    %v68 = vsel %vm48, %v29, 0
    %v71 = vsel %vm48, %v30, 0
    %v74 = vsel %vm48, %v31, 0
    %v77 = vsel %vm48, %v32, 0
    %v80 = vsel %vm48, %v33, 0
    %v83 = vsel %vm48, %v34, 0
    %v86 = vsel %vm48, %v35, 0
    %v89 = vsel %vm48, %v36, 0
    %v92 = vsel %vm48, %v37, 0
    %v95 = vsel %vm48, %v38, 0
    %97 = vmatprep.subr.mxu0 0.0
    %98 = vmatpush1.msra.mxu0 %v39
    %99 = vmatprep.subr.mxu0 0.0
    %100 = vmatpush1.msra.mxu0 %v40
    %101 = vmatprep.subr.mxu0 0.0
    %102 = vmatpush1.msra.mxu0 0.0
    %103 = vmatprep.subr.mxu0 0.0
    %104 = vmatpush1.msra.mxu0 0.0
    %105 = vmatprep.subr.mxu0 0.0
    %106 = vmatpush1.msra.mxu0 0.0
    %107 = vmatprep.subr.mxu0 0.0
    %108 = vmatpush1.msra.mxu0 0.0
    %109 = vmatprep.subr.mxu0 0.0
    %110 = vmatpush1.msra.mxu0 0.0
    %111 = vmatprep.subr.mxu0 0.0
    %112 = vmatpush1.msra.mxu0 0.0
    %113 = vmatprep.subr.mxu0 0.0
    %114 = vmatpush1.msra.mxu0 0.0
    %115 = vmatprep.subr.mxu0 0.0
    %116 = vmatpush1.msra.mxu0 0.0
    %117 = vmatprep.subr.mxu0 0.0
    %118 = vmatpush1.msra.mxu0 0.0
    %119 = vmatprep.subr.mxu0 0.0
    %120 = vmatpush1.msra.mxu0 0.0
    %121 = vmatprep.subr.mxu0 0.0
    %122 = vmatpush1.msra.mxu0 0.0
    %123 = vmatprep.subr.mxu0 0.0
    %124 = vmatpush1.msra.mxu0 0.0
    %125 = vmatprep.subr.mxu0 0.0
    %126 = vmatpush1.msra.mxu0 0.0
    %127 = vmatprep.subr.mxu0 0.0
    %128 = vmatpush1.msra.mxu0 0.0
    %129 = vmatprep.subr.mxu0 0.0
    %130 = vmatpush1.msra.mxu0 0.0
    %131 = vmatprep.subr.mxu0 0.0
    %132 = vmatpush1.msra.mxu0 0.0
    %133 = vmatprep.subr.mxu0 0.0
    %134 = vmatpush1.msra.mxu0 0.0
    %135 = vmatprep.subr.mxu0 0.0
    %136 = vmatpush1.msra.mxu0 0.0
    %137 = vmatprep.subr.mxu0 0.0
    %138 = vmatpush1.msra.mxu0 0.0
    %139 = vmatprep.subr.mxu0 0.0
    %140 = vmatpush1.msra.mxu0 0.0
    %141 = vmatprep.subr.mxu0 0.0
    %142 = vmatpush1.msra.mxu0 0.0
    %143 = vmatprep.subr.mxu0 0.0
    %144 = vmatpush1.msra.mxu0 0.0
    %145 = vmatprep.subr.mxu0 0.0
    %146 = vmatpush1.msra.mxu0 0.0
    %147 = vmatprep.subr.mxu0 0.0
    %148 = vmatpush1.msra.mxu0 0.0
    %149 = vmatprep.subr.mxu0 0.0
    %150 = vmatpush1.msra.mxu0 0.0
    %151 = vmatprep.subr.mxu0 0.0
    %152 = vmatpush1.msra.mxu0 0.0
    %153 = vmatprep.subr.mxu0 0.0
    %154 = vmatpush1.msra.mxu0 0.0
    %155 = vmatprep.subr.mxu0 0.0
    %156 = vmatpush1.msra.mxu0 0.0
    %157 = vmatprep.subr.mxu0 0.0
    %158 = vmatpush1.msra.mxu0 0.0
    %159 = vmatprep.subr.mxu0 0.0
    %160 = vmatpush1.msra.mxu0 0.0
    %161 = vmatprep.mubr.f32.mxu0 0.0
    %162 = vmatmul.mubr.f32.gmra.mrb[0].mxu0 %v50
    %v163 = vpop.f32.mrb[0].mxu0
    %v164 = vadd.f32 %v46, %v163
    %v165 = vpop.f32.mrb[0].mxu0
    %166 = vmatprep.mubr.f32.mxu0 0.0
    %167 = vmatmul.mubr.f32.gmra.mrb[0].mxu0 %v53
    %v168 = vpop.f32.mrb[0].mxu0
    %v169 = vadd.f32 %v46, %v168
    %v170 = vpop.f32.mrb[0].mxu0
    %171 = vmatprep.mubr.f32.mxu0 0.0
    %172 = vmatmul.mubr.f32.gmra.mrb[0].mxu0 %v56
    %v173 = vpop.f32.mrb[0].mxu0
    %v174 = vadd.f32 %v46, %v173
    %v175 = vpop.f32.mrb[0].mxu0
    %176 = vmatprep.mubr.f32.mxu0 0.0
    %177 = vmatmul.mubr.f32.gmra.mrb[0].mxu0 %v59
    %v178 = vpop.f32.mrb[0].mxu0
    %v179 = vadd.f32 %v46, %v178
    %v180 = vpop.f32.mrb[0].mxu0
    %181 = vmatprep.mubr.f32.mxu0 0.0
    %182 = vmatmul.mubr.f32.gmra.mrb[0].mxu0 %v62
    %v183 = vpop.f32.mrb[0].mxu0
    %v184 = vadd.f32 %v46, %v183
    %v185 = vpop.f32.mrb[0].mxu0
    %186 = vmatprep.mubr.f32.mxu0 0.0
    %187 = vmatmul.mubr.f32.gmra.mrb[0].mxu0 %v65
    %v188 = vpop.f32.mrb[0].mxu0
    %v189 = vadd.f32 %v46, %v188
    %v190 = vpop.f32.mrb[0].mxu0
    %191 = vmatprep.mubr.f32.mxu0 0.0
    %192 = vmatmul.mubr.f32.gmra.mrb[0].mxu0 %v68
    %v193 = vpop.f32.mrb[0].mxu0
    %v194 = vadd.f32 %v46, %v193
    %v195 = vpop.f32.mrb[0].mxu0
    %196 = vmatprep.mubr.f32.mxu0 0.0
    %197 = vmatmul.mubr.f32.gmra.mrb[0].mxu0 %v71
    %v198 = vpop.f32.mrb[0].mxu0
    %v199 = vadd.f32 %v46, %v198
    %v200 = vpop.f32.mrb[0].mxu0
    %201 = vmatprep.mubr.f32.mxu0 0.0
    %202 = vmatmul.mubr.f32.gmra.mrb[0].mxu0 %v74
    %v203 = vpop.f32.mrb[0].mxu0
    %v204 = vadd.f32 %v46, %v203
    %v205 = vpop.f32.mrb[0].mxu0
    %206 = vmatprep.mubr.f32.mxu0 0.0
    %207 = vmatmul.mubr.f32.gmra.mrb[0].mxu0 %v77
    %v208 = vpop.f32.mrb[0].mxu0
    %v209 = vadd.f32 %v46, %v208
    %v210 = vpop.f32.mrb[0].mxu0
    %211 = vmatprep.mubr.f32.mxu0 0.0
    %212 = vmatmul.mubr.f32.gmra.mrb[0].mxu0 %v80
    %v213 = vpop.f32.mrb[0].mxu0
    %v214 = vadd.f32 %v46, %v213
    %v215 = vpop.f32.mrb[0].mxu0
    %216 = vmatprep.mubr.f32.mxu0 0.0
    %217 = vmatmul.mubr.f32.gmra.mrb[0].mxu0 %v83
    %v218 = vpop.f32.mrb[0].mxu0
    %v219 = vadd.f32 %v46, %v218
    %v220 = vpop.f32.mrb[0].mxu0
    %221 = vmatprep.mubr.f32.mxu0 0.0
    %222 = vmatmul.mubr.f32.gmra.mrb[0].mxu0 %v86
    %v223 = vpop.f32.mrb[0].mxu0
    %v224 = vadd.f32 %v46, %v223
    %v225 = vpop.f32.mrb[0].mxu0
    %226 = vmatprep.mubr.f32.mxu0 0.0
    %227 = vmatmul.mubr.f32.gmra.mrb[0].mxu0 %v89
    %v228 = vpop.f32.mrb[0].mxu0
    %v229 = vadd.f32 %v46, %v228
    %v230 = vpop.f32.mrb[0].mxu0
    %231 = vmatprep.mubr.f32.mxu0 0.0
    %232 = vmatmul.mubr.f32.gmra.mrb[0].mxu0 %v92
    %v233 = vpop.f32.mrb[0].mxu0
    %v234 = vadd.f32 %v46, %v233
    %v235 = vpop.f32.mrb[0].mxu0
    %236 = vmatprep.mubr.f32.mxu0 0.0
    %237 = vmatmul.mubr.f32.gmra.mrb[0].mxu0 %v95
    %v238 = vpop.f32.mrb[0].mxu0
    %v239 = vadd.f32 %v46, %v238
    %v240 = vpop.f32.mrb[0].mxu0
    %241 = vdwg.mxu0
    %v242 = vmax.f32 %v164, 0.0
    %v243 = vmax.f32 %v169, 0.0
    %v244 = vmax.f32 %v174, 0.0
    %v245 = vmax.f32 %v179, 0.0
    %v246 = vmax.f32 %v184, 0.0
    %v247 = vmax.f32 %v189, 0.0
    %v248 = vmax.f32 %v194, 0.0
    %v249 = vmax.f32 %v199, 0.0
    %v250 = vmax.f32 %v204, 0.0
    %v251 = vmax.f32 %v209, 0.0
    %v252 = vmax.f32 %v214, 0.0
    %v253 = vmax.f32 %v219, 0.0
    %v254 = vmax.f32 %v224, 0.0
    %v255 = vmax.f32 %v229, 0.0
    %v256 = vmax.f32 %v234, 0.0
    %v257 = vmax.f32 %v239, 0.0
    %v258 = vld [vmem:[%s3] sm:$0x1]
    %v259 = vld [vmem:[#allocation2] sm:$0x1]
    %261 = vset.pattern.permute.xlu0 0
    %262 = vperm.xlu0 %261, %v259
    %v263 = vpop.permute.xlu0 %262
    %v265 = vlaneseq
    %v266 = vshrl.u32 %v265, 7
    %v267 = vsub.s32 0, %v266
    %v268 = vrot.slane %v263, %v267
    %vm269 = vcmask 261120
    %v271 = vsel %vm269, %v258, 0
    %v274 = vsel %vm269, %v242, 0
    %v277 = vsel %vm269, %v243, 0
    %v280 = vsel %vm269, %v244, 0
    %v283 = vsel %vm269, %v245, 0
    %v286 = vsel %vm269, %v246, 0
    %v289 = vsel %vm269, %v247, 0
    %v292 = vsel %vm269, %v248, 0
    %v295 = vsel %vm269, %v249, 0
    %v298 = vsel %vm269, %v250, 0
    %v301 = vsel %vm269, %v251, 0
    %v304 = vsel %vm269, %v252, 0
    %v307 = vsel %vm269, %v253, 0
    %v310 = vsel %vm269, %v254, 0
    %v313 = vsel %vm269, %v255, 0
    %v316 = vsel %vm269, %v256, 0
    %v319 = vsel %vm269, %v257, 0
    %321 = vmatprep.subr.mxu0 0.0
    %322 = vmatpush1.xpose.msra.mxu0 %v274
    %323 = vmatprep.subr.mxu0 0.0
    %324 = vmatpush1.xpose.msra.mxu0 %v277
    %325 = vmatprep.subr.mxu0 0.0
    %326 = vmatpush1.xpose.msra.mxu0 %v280
    %327 = vmatprep.subr.mxu0 0.0
    %328 = vmatpush1.xpose.msra.mxu0 %v283
    %329 = vmatprep.subr.mxu0 0.0
    %330 = vmatpush1.xpose.msra.mxu0 %v286
    %331 = vmatprep.subr.mxu0 0.0
    %332 = vmatpush1.xpose.msra.mxu0 %v289
    %333 = vmatprep.subr.mxu0 0.0
    %334 = vmatpush1.xpose.msra.mxu0 %v292
    %335 = vmatprep.subr.mxu0 0.0
    %336 = vmatpush1.xpose.msra.mxu0 %v295
    %337 = vmatprep.subr.mxu0 0.0
    %338 = vmatpush1.xpose.msra.mxu0 %v298
    %339 = vmatprep.subr.mxu0 0.0
    %340 = vmatpush1.xpose.msra.mxu0 %v301
    %341 = vmatprep.subr.mxu0 0.0
    %342 = vmatpush1.xpose.msra.mxu0 %v304
    %343 = vmatprep.subr.mxu0 0.0
    %344 = vmatpush1.xpose.msra.mxu0 %v307
    %345 = vmatprep.subr.mxu0 0.0
    %346 = vmatpush1.xpose.msra.mxu0 %v310
    %347 = vmatprep.subr.mxu0 0.0
    %348 = vmatpush1.xpose.msra.mxu0 %v313
    %349 = vmatprep.subr.mxu0 0.0
    %350 = vmatpush1.xpose.msra.mxu0 %v316
    %351 = vmatprep.subr.mxu0 0.0
    %352 = vmatpush1.xpose.msra.mxu0 %v319
    %353 = vmatprep.subr.mxu0 0.0
    %354 = vmatpush1.xpose.msra.mxu0 0.0
    %355 = vmatprep.subr.mxu0 0.0
    %356 = vmatpush1.xpose.msra.mxu0 0.0
    %357 = vmatprep.subr.mxu0 0.0
    %358 = vmatpush1.xpose.msra.mxu0 0.0
    %359 = vmatprep.subr.mxu0 0.0
    %360 = vmatpush1.xpose.msra.mxu0 0.0
    %361 = vmatprep.subr.mxu0 0.0
    %362 = vmatpush1.xpose.msra.mxu0 0.0
    %363 = vmatprep.subr.mxu0 0.0
    %364 = vmatpush1.xpose.msra.mxu0 0.0
    %365 = vmatprep.subr.mxu0 0.0
    %366 = vmatpush1.xpose.msra.mxu0 0.0
    %367 = vmatprep.subr.mxu0 0.0
    %368 = vmatpush1.xpose.msra.mxu0 0.0
    %369 = vmatprep.subr.mxu0 0.0
    %370 = vmatpush1.xpose.msra.mxu0 0.0
    %371 = vmatprep.subr.mxu0 0.0
    %372 = vmatpush1.xpose.msra.mxu0 0.0
    %373 = vmatprep.subr.mxu0 0.0
    %374 = vmatpush1.xpose.msra.mxu0 0.0
    %375 = vmatprep.subr.mxu0 0.0
    %376 = vmatpush1.xpose.msra.mxu0 0.0
    %377 = vmatprep.subr.mxu0 0.0
    %378 = vmatpush1.xpose.msra.mxu0 0.0
    %379 = vmatprep.subr.mxu0 0.0
    %380 = vmatpush1.xpose.msra.mxu0 0.0
    %381 = vmatprep.subr.mxu0 0.0
    %382 = vmatpush1.xpose.msra.mxu0 0.0
    %383 = vmatprep.subr.mxu0 0.0
    %384 = vmatpush1.xpose.msra.mxu0 0.0
    %385 = vmatprep.mubr.f32.mxu0 0.0
    %386 = vmatmul.mubr.f32.gmra.mrb[0].mxu0 %v271
    %v387 = vpop.f32.mrb[0].mxu0
    %v388 = vadd.f32 %v268, %v387
    %v389 = vpop.f32.mrb[0].mxu0
    %390 = vdwg.mxu0
    %391 = vst [vmem:[#allocation3] sm:$0x1] %v388
    // Predicated region
    $region22: #{tpu_custom_call.1} parent=1 // pred_check
      _
    $region23: #{tpu_custom_call.1} parent=1 // pred_check_branch
      %393 = sbr.rel (0) target = $region25
    $region24: #{tpu_custom_call.1} parent=1 // pred_region
      %s395 = ssub.s32 16, 16
      %396 = vsyncadd [#allocation4], %s395
      %s398 = sshll.u32 [#allocation3], 4
      %s399 = int_to_ptr.vmem [resolvable:$true] %s398
      %401 = dma.vmem_to_hbm [thread:$0]  %s399, 16, %s5, [#allocation4]
    $region25: #{tpu_custom_call.1} parent=1 // pred_fallthru
      _
    // Predicated region
    $region26: #{tpu_custom_call.1} parent=1 // pred_check
      _
    $region27: #{tpu_custom_call.1} parent=1 // pred_check_branch
      %403 = sbr.rel (0) target = $region29
    $region28: #{tpu_custom_call.1} parent=1 // pred_region
      %404 = dma.done [#allocation4], 16
    $region29: #{tpu_custom_call.1} parent=1 // pred_fallthru
      _
    %405 = vsyncpa [#allocation4], 1

</llo_original>
